<compile_context>
chip_gen: v5e
topology: v5e:2x2
jax: 0.10.0
libtpu: 0.0.40
codegen_flags: <defaults>
</compile_context>

<pallas_src>
import functools

import jax
import jax.numpy as jnp
from jax.experimental import pallas as pl
from jax.experimental.pallas import tpu as pltpu

F32 = jnp.float32
BF16 = jnp.bfloat16
BIG = 1e10  # matches torch.nan_to_num(posinf=1e10, neginf=-1e10)


def _round_up(x, m):
    return ((x + m - 1) // m) * m


def _nan_to_num(x):
    x = jnp.where(jnp.isnan(x), jnp.zeros_like(x), x)
    x = jnp.where(x == jnp.inf, jnp.full_like(x, BIG), x)
    x = jnp.where(x == -jnp.inf, jnp.full_like(x, -BIG), x)
    return x


def _vmem_capacity_bytes():
    """Per-core VMEM capacity; conservative fallback if the query fails."""
    try:
        info = pltpu.get_tpu_info()
        cap = getattr(info, "vmem_capacity_bytes", None)
        if cap:
            return int(cap)
    except Exception:
        pass
    return 64 * 1024 * 1024  # v7x per-core VMEM (smallest current generation)


# --------------------------------------------------------------------------
# Fused row-tiled MLP kernel:  y = relu?(x @ W1 + b1) ... @ Wk (+ bk)
# --------------------------------------------------------------------------
def _mlp_kernel(*refs, cfg):
    x_ref = refs[0]
    o_ref = refs[-1]
    prefs = refs[1:-1]
    y = x_ref[...]
    k = 0
    for has_bias, relu in cfg:
        w = prefs[k][...]
        k += 1
        y = jnp.dot(y, w, preferred_element_type=jnp.float32)
        if has_bias:
            y = y + prefs[k][...]
            k += 1
        if relu:
            y = jnp.maximum(y, 0.0)
    o_ref[...] = y


def fused_mlp(x, layers, *, tile_rows=1024):
    """layers: list of (W, b_or_None, relu). All layers fused in one kernel."""
    N, Din = x.shape
    x = x.astype(F32)
    TN = min(tile_rows, _round_up(max(N, 1), 8))
    Np = _round_up(N, TN)
    if Np != N:
        x = jnp.concatenate([x, jnp.zeros((Np - N, Din), F32)], axis=0)
    Dout = layers[-1][0].shape[1]

    operands = [x]
    in_specs = [pl.BlockSpec((TN, Din), lambda i: (i, 0))]
    cfg = []
    for W, b, relu in layers:
        W = W.astype(F32)
        operands.append(W)
        in_specs.append(pl.BlockSpec(W.shape, lambda i: (0, 0)))
        if b is not None:
            b2 = b.reshape(1, -1).astype(F32)
            operands.append(b2)
            in_specs.append(pl.BlockSpec(b2.shape, lambda i: (0, 0)))
        cfg.append((b is not None, relu))

    out = pl.pallas_call(
        functools.partial(_mlp_kernel, cfg=tuple(cfg)),
        out_shape=jax.ShapeDtypeStruct((Np, Dout), F32),
        grid=(Np // TN,),
        in_specs=in_specs,
        out_specs=pl.BlockSpec((TN, Dout), lambda i: (i, 0)),
        compiler_params=pltpu.CompilerParams(
            dimension_semantics=("parallel",)),
    )(*operands)
    return out[:N]


# --------------------------------------------------------------------------
# Pre-projection kernel (hoisted out of the edge loop):
#   h = nan_to_num(node @ W_all)          (N, H*Fout)  f32
#   pay_src = (h @ A1)                    (N, H)       bf16   (src gather)
#   pay_dst = [h @ A2 | h]                (N, H + HF)  bf16   (dst gather)
# --------------------------------------------------------------------------
def _preproject_kernel(node_ref, w_ref, a1_ref, a2_ref, h_ref, psrc_ref, pdst_ref):
    h = jnp.dot(node_ref[...], w_ref[...], preferred_element_type=jnp.float32)
    h = _nan_to_num(h)
    h_ref[...] = h
    s1 = jnp.dot(h, a1_ref[...], preferred_element_type=jnp.float32)
    s2 = jnp.dot(h, a2_ref[...], preferred_element_type=jnp.float32)
    psrc_ref[...] = s1.astype(BF16)
    pdst_ref[...] = jnp.concatenate([s2, h], axis=1).astype(BF16)


# --------------------------------------------------------------------------
# Edge-tiled attention kernel.  Grid = (ncores, edge_tiles).
#   outputs: acc (ncores, Nn, H+HF)  = per-core [e_rowsum | sum edge_e*h_dst]
#            edge_e (Ep, H)          (only when emit_ee)
# --------------------------------------------------------------------------
def _spgat_edge_kernel(psrc_ref, pdst_ref, a3_ref, exp_ref, edges_ref, *rest,
                       alpha, nheads, emit_ee):
    if emit_ee:
        acc_ref, ee_ref = rest
    else:
        (acc_ref,) = rest
        ee_ref = None

    Nn = psrc_ref.shape[0]
    TE = edges_ref.shape[0]
    H = nheads

    @pl.when(pl.program_id(1) == 0)
    def _():
        acc_ref[...] = jnp.zeros_like(acc_ref)

    src = edges_ref[:, 0:1]                                   # (TE,1) int32
    dst = edges_ref[:, 1:2]
    ef = pltpu.bitcast(edges_ref[:, 2:3], jnp.float32)        # (TE,1) f32

    # One-hots via direct bool->bf16 cast (saves the f32 select per element).
    ids = jax.lax.broadcasted_iota(jnp.int32, (TE, Nn), 1)
    S = (src == ids).astype(BF16)                             # (TE, Nn) src
    D = (dst == ids).astype(BF16)                             # (TE, Nn) dst

    g_dst = jnp.dot(D, pdst_ref[...], preferred_element_type=jnp.float32)
    s_dst = g_dst[:, :H]                                      # (TE, H)
    h_dst = g_dst[:, H:]                                      # (TE, HF)
    s_src = jnp.dot(S, psrc_ref[...], preferred_element_type=jnp.float32)

    score = s_src + s_dst + ef * a3_ref[...]                  # (TE, H)
    lrelu = jnp.where(score > 0, score, alpha * score)        # LeakyReLU(alpha)
    edge_e = _nan_to_num(jnp.exp(-lrelu))                     # exp may overflow

    # Broadcast edge_e per head over its Fout columns (tiny K=H MXU matmul).
    ee_full = jnp.dot(edge_e, exp_ref[...], preferred_element_type=jnp.float32)

    # Fused scatter: one S^T contraction accumulates [e_rowsum | h_prime num.].
    payload = jnp.concatenate([edge_e, ee_full * h_dst], axis=1).astype(BF16)
    acc_ref[0] += jax.lax.dot_general(
        S, payload, (((0,), (0,)), ((), ())),
        preferred_element_type=jnp.float32)

    if emit_ee:
        ee_ref[...] = edge_e


# --------------------------------------------------------------------------
# Combine / epilogue kernel: sum per-core partials, divide, residual, ELU.
# --------------------------------------------------------------------------
def _spgat_combine_kernel(acc_ref, h_ref, exp_ref, out_ref, *, nheads):
    H = nheads
    acc = acc_ref[0]
    for c in range(1, acc_ref.shape[0]):                      # static unroll
        acc = acc + acc_ref[c]
    e_rowsum = acc[:, :H]                                     # (TN, H)
    hp = acc[:, H:]                                           # (TN, HF)
    denom = jnp.dot(e_rowsum, exp_ref[...],
                    preferred_element_type=jnp.float32)       # (TN, HF)
    hp = hp / denom                                           # exact divide
    hp = jnp.where(jnp.isnan(hp), jnp.zeros_like(hp), hp)     # 0/0 -> 0
    hp = h_ref[...] + hp
    hp = _nan_to_num(hp)
    out_ref[...] = jnp.where(hp > 0, hp, jnp.exp(hp) - 1.0)   # ELU


def _edge_kernel_vmem_bytes(te, nn, h, hf, emit_ee):
    """Conservative VMEM footprint estimate for one edge-kernel invocation."""
    lane = lambda c: _round_up(max(c, 1), 128)
    sub = lambda r: _round_up(max(r, 1), 8)
    onehots = 2 * te * lane(nn) * 2                      # S, D (bf16)
    edge_tmp = 6 * te * lane(h + hf) * 4                 # g_dst/ee_full/payload/...
    edges_op = 2 * te * lane(3) * 4                      # packed edges (dbl buf)
    ee_out = (2 * te * lane(h) * 4) if emit_ee else 0
    payload_in = 2 * sub(nn) * (lane(h) + lane(h + hf)) * 2
    acc_out = 2 * sub(nn) * lane(h + hf) * 4
    return onehots + edge_tmp + edges_op + ee_out + payload_in + acc_out \
        + 2 * 1024 * 1024                                # a3/expand/misc headroom


# --------------------------------------------------------------------------
# Fused multi-head SpGraphAttentionLayer forward.
# --------------------------------------------------------------------------
def fused_spgat_attention(node, edge, edge_feat, W_all, A1, A2, a3, alpha,
                          *, max_tile_edges=4096, emit_edge_e=False):
    """Fused forward of `nheads` SpGraphAttentionLayers sharing (edge, ef).

    node: (N, Fin); edge: (E, 2) int (src, dst); edge_feat: (E, 1)
    W_all: (Fin, H*Fout); A1, A2: (H*Fout, H) block-diagonal; a3: (1, H)
    Returns out (N, H*Fout) (per-head concat), and edge_e (E, H) when
    emit_edge_e=True.
    """
    N, Fin = node.shape
    HF = W_all.shape[1]
    H = a3.shape[1]
    E = edge.shape[0]
    Fout = HF // H

    # ---- node row tiling ----
    TN = min(1024, _round_up(max(N, 1), 8))
    Nn = _round_up(N, TN)
    node_p = node.astype(F32)
    if Nn != N:
        node_p = jnp.concatenate([node_p, jnp.zeros((Nn - N, Fin), F32)], 0)

    # ---- pre-projection (hoisted out of the edge loop) ----
    h, pay_src, pay_dst = pl.pallas_call(
        _preproject_kernel,
        out_shape=(jax.ShapeDtypeStruct((Nn, HF), F32),
                   jax.ShapeDtypeStruct((Nn, H), BF16),
                   jax.ShapeDtypeStruct((Nn, H + HF), BF16)),
        grid=(Nn // TN,),
        in_specs=[pl.BlockSpec((TN, Fin), lambda i: (i, 0)),
                  pl.BlockSpec((Fin, HF), lambda i: (0, 0)),
                  pl.BlockSpec((HF, H), lambda i: (0, 0)),
                  pl.BlockSpec((HF, H), lambda i: (0, 0))],
        out_specs=(pl.BlockSpec((TN, HF), lambda i: (i, 0)),
                   pl.BlockSpec((TN, H), lambda i: (i, 0)),
                   pl.BlockSpec((TN, H + HF), lambda i: (i, 0))),
        compiler_params=pltpu.CompilerParams(
            dimension_semantics=("parallel",)),
    )(node_p, W_all.astype(F32), A1.astype(F32), A2.astype(F32))

    # (H, HF) head-broadcast matrix: expand[h, h*Fout:(h+1)*Fout] = 1
    head_of_col = jnp.arange(HF, dtype=jnp.int32) // Fout
    expand = (head_of_col[None, :] ==
              jnp.arange(H, dtype=jnp.int32)[:, None]).astype(F32)

    # ---- generation-aware VMEM budget + edge-tile selection ----
    vmem_limit = max(16 * 1024 * 1024,
                     min(int(_vmem_capacity_bytes() * 0.6), 64 * 1024 * 1024))

    def _fits(te):
        return _edge_kernel_vmem_bytes(te, Nn, H, HF, emit_edge_e) <= vmem_limit

    TE = min(max_tile_edges, _round_up(max(E, 1), 128))
    TE = max(128, (TE // 128) * 128)
    while TE > 128 and not _fits(TE):
        TE -= 128
    if not _fits(TE):
        # TODO(synk): node-window tiling (sorted edges + scalar-prefetch window
        # offsets) so the one-hots become (TE, N_window) for very large N.
        raise ValueError(
            f"SpGAT edge kernel: {Nn} nodes do not fit the dense one-hot "
            f"gather/scatter within {vmem_limit} bytes of VMEM even at the "
            f"minimum edge tile; node-window tiling is required.")

    n_tiles = max(1, (E + TE - 1) // TE)
    ncores = 2 if n_tiles >= 2 else 1          # v7x: 2nd TensorCore; harmless on 1-TC chips
    n_tiles = _round_up(n_tiles, ncores)
    Ep = n_tiles * TE
    tpc = n_tiles // ncores

    # ---- pack (src, dst, ef) into ONE int32 operand (ef bit-cast) ----
    # Padded edges use the out-of-range sentinel Nn -> all-zero one-hot rows.
    src = jnp.full((Ep, 1), Nn, jnp.int32).at[:E, 0].set(edge[:, 0].astype(jnp.int32))
    dst = jnp.full((Ep, 1), Nn, jnp.int32).at[:E, 0].set(edge[:, 1].astype(jnp.int32))
    ef = jnp.zeros((Ep, 1), F32).at[:E].set(edge_feat.astype(F32).reshape(E, 1))
    edges_packed = jnp.concatenate(
        [src, dst, jax.lax.bitcast_convert_type(ef, jnp.int32)], axis=1)

    # ---- edge kernel ----
    if emit_edge_e:
        out_shape = (jax.ShapeDtypeStruct((ncores, Nn, H + HF), F32),
                     jax.ShapeDtypeStruct((Ep, H), F32))
        out_specs = (pl.BlockSpec((1, Nn, H + HF), lambda c, e: (c, 0, 0)),
                     pl.BlockSpec((TE, H), lambda c, e: (c * tpc + e, 0)))
    else:
        out_shape = jax.ShapeDtypeStruct((ncores, Nn, H + HF), F32)
        out_specs = pl.BlockSpec((1, Nn, H + HF), lambda c, e: (c, 0, 0))

    res = pl.pallas_call(
        functools.partial(_spgat_edge_kernel, alpha=float(alpha), nheads=H,
                          emit_ee=emit_edge_e),
        out_shape=out_shape,
        grid=(ncores, tpc),
        in_specs=[
            pl.BlockSpec((Nn, H), lambda c, e: (0, 0)),        # pay_src (resident)
            pl.BlockSpec((Nn, H + HF), lambda c, e: (0, 0)),   # pay_dst (resident)
            pl.BlockSpec((1, H), lambda c, e: (0, 0)),         # a3
            pl.BlockSpec((H, HF), lambda c, e: (0, 0)),        # expand
            pl.BlockSpec((TE, 3), lambda c, e: (c * tpc + e, 0)),  # packed edges
        ],
        out_specs=out_specs,
        compiler_params=pltpu.CompilerParams(
            dimension_semantics=("parallel", "arbitrary"),
            vmem_limit_bytes=vmem_limit),
    )(pay_src, pay_dst, a3.astype(F32), expand, edges_packed)

    if emit_edge_e:
        acc, edge_e = res
    else:
        acc = res

    # ---- combine / epilogue ----
    out = pl.pallas_call(
        functools.partial(_spgat_combine_kernel, nheads=H),
        out_shape=jax.ShapeDtypeStruct((Nn, HF), F32),
        grid=(Nn // TN,),
        in_specs=[pl.BlockSpec((ncores, TN, H + HF), lambda i: (0, i, 0)),
                  pl.BlockSpec((TN, HF), lambda i: (i, 0)),
                  pl.BlockSpec((H, HF), lambda i: (0, 0))],
        out_specs=pl.BlockSpec((TN, HF), lambda i: (i, 0)),
        compiler_params=pltpu.CompilerParams(
            dimension_semantics=("parallel",)),
    )(acc, h, expand)
    out = out[:N]

    if emit_edge_e:
        return out, edge_e[:E]
    return out


def _stack_heads(head_params, Fout):
    """Stack per-head (W, a) into fused-kernel operands."""
    H = len(head_params)
    W = jnp.concatenate([p["W"].astype(F32) for p in head_params], axis=1)   # (Fin,H*Fout)
    a = jnp.stack([p["a"].reshape(-1).astype(F32) for p in head_params], 0)  # (H,2F+1)
    a1 = a[:, :Fout]
    a2 = a[:, Fout:2 * Fout]
    a3 = a[:, 2 * Fout].reshape(1, H)
    eye = jnp.eye(H, dtype=F32)
    A1 = (a1[:, :, None] * eye[:, None, :]).reshape(H * Fout, H)   # block-diagonal
    A2 = (a2[:, :, None] * eye[:, None, :]).reshape(H * Fout, H)
    return W, A1, A2, a3


# --------------------------------------------------------------------------
# Parameter init (deterministic, synthetic — shapes follow SpGAT.__init__)
# --------------------------------------------------------------------------
def _xavier_normal(key, shape, gain=1.414):
    fan_in, fan_out = shape
    std = gain * (2.0 / (fan_in + fan_out)) ** 0.5
    return std * jax.random.normal(key, shape, F32)


def init_params(key, nfeat, nhid, nclass, nheads, embed=64):
    keys = iter(jax.random.split(key, 128))

    def lin(din, dout, bias=True):
        w = jax.random.normal(next(keys), (din, dout), F32) / jnp.sqrt(
            jnp.asarray(din, F32))
        b = (0.01 * jax.random.normal(next(keys), (dout,), F32)) if bias else None
        return {"W": w, "b": b}

    def att(din, dout):
        return {"W": _xavier_normal(next(keys), (din, dout)),
                "a": _xavier_normal(next(keys), (1, 2 * dout + 1))}

    params = {
        "input": lin(nfeat, embed),
        "att_u_to_v": [att(embed, nhid) for _ in range(nheads)],
        "att_v_to_u": [att(embed, nhid) for _ in range(nheads)],
        "out_u_to_v": att(nhid * nheads, embed),
        "out_v_to_u": att(nhid * nheads, embed),
        "output": [lin(embed, embed), lin(embed, embed), lin(embed, nclass, bias=False)],
        "select": [lin(embed, embed), lin(embed, embed), lin(embed, nclass, bias=False)],
    }
    return params


def _squeeze_last(x):
    return jnp.squeeze(x, -1) if x.shape[-1] == 1 else x


# --------------------------------------------------------------------------
# SpGAT forward
# --------------------------------------------------------------------------
def spgat_forward(params, x, edgeA, edgeB, edge_feat, alpha):
    # input_module (single fused linear)
    x = fused_mlp(x, [(params["input"]["W"], params["input"]["b"], False)])

    nhid = params["att_u_to_v"][0]["W"].shape[1]
    embed = params["out_u_to_v"]["W"].shape[1]

    # ---- first multi-head attention block (u -> v), all heads fused ----
    Wm, A1, A2, a3 = _stack_heads(params["att_u_to_v"], nhid)
    x_heads, ee = fused_spgat_attention(x, edgeA, edge_feat, Wm, A1, A2, a3, alpha,
                                        emit_edge_e=True)
    new_edge = jnp.mean(ee, axis=1).reshape(-1, 1)              # (E, 1)
    Wo, A1o, A2o, a3o = _stack_heads([params["out_u_to_v"]], embed)
    x = fused_spgat_attention(x_heads, edgeA, edge_feat, Wo, A1o, A2o, a3o, alpha,
                              emit_edge_e=False)

    # ---- second multi-head attention block (v -> u), all heads fused ----
    Wm2, A12, A22, a32 = _stack_heads(params["att_v_to_u"], nhid)
    x_heads2, ee2 = fused_spgat_attention(x, edgeB, new_edge, Wm2, A12, A22, a32,
                                          alpha, emit_edge_e=True)
    new_edge_ = jnp.mean(ee2, axis=1).reshape(-1, 1)            # (E, 1)
    Wo2, A1o2, A2o2, a3o2 = _stack_heads([params["out_v_to_u"]], embed)
    x = fused_spgat_attention(x_heads2, edgeB, new_edge, Wo2, A1o2, A2o2, a3o2,
                              alpha, emit_edge_e=False)

    # output heads (each 3-layer MLP fused into one kernel)
    sel, outp = params["select"], params["output"]
    y = fused_mlp(x, [(sel[0]["W"], sel[0]["b"], True),
                      (sel[1]["W"], sel[1]["b"], True),
                      (sel[2]["W"], None, False)])
    out = fused_mlp(x, [(outp[0]["W"], outp[0]["b"], True),
                        (outp[1]["W"], outp[1]["b"], True),
                        (outp[2]["W"], None, False)])
    return _squeeze_last(out), _squeeze_last(y), new_edge_


if __name__ == "__main__":
    nfeat, nhid, nclass, nheads = 6, 16, 2, 4
    alpha = 0.2
    N, E = 32, 64

    key = jax.random.PRNGKey(0)
    k_x, k_e, k_f, k_p = jax.random.split(key, 4)

    x = jax.random.normal(k_x, (N, nfeat), F32)
    edgeA = jax.random.randint(k_e, (E, 2), 0, N, dtype=jnp.int32)
    edgeB = jnp.stack([edgeA[:, 1], edgeA[:, 0]], axis=1)  # reversed edges
    edge_feat = jax.random.normal(k_f, (E, 1), F32)

    params = init_params(k_p, nfeat, nhid, nclass, nheads)

    out, y, new_edge_ = spgat_forward(params, x, edgeA, edgeB, edge_feat, alpha)
    jax.block_until_ready((out, y, new_edge_))
    assert out.shape == (N, nclass) and y.shape == (N, nclass)
    assert new_edge_.shape == (E, 1)
    print("KERNEL_OK")
</pallas_src>

<mosaic_0001>
module attributes {stable_mosaic.version = 11 : i64} {
  func.func @_mlp_kernel(%arg0: i32, %arg1: memref<32x6xf32, #tpu.memory_space<vmem>>, %arg2: memref<6x64xf32, #tpu.memory_space<vmem>>, %arg3: memref<1x64xf32, #tpu.memory_space<vmem>>, %arg4: memref<32x64xf32, #tpu.memory_space<vmem>>) attributes {dimension_semantics = [#tpu.dimension_semantics<parallel>], iteration_bounds = array<i64: 1>, scalar_prefetch = 0 : i64, scratch_operands = 0 : i64, tpu.core_type = #tpu.core_type<tc>, window_params = [{transform_indices = @transform_0, window_bounds = array<i64: 32, 6>}, {pipeline_mode = #tpu.pipeline_mode<synchronous>, transform_indices = @transform_1, window_bounds = array<i64: 6, 64>}, {pipeline_mode = #tpu.pipeline_mode<synchronous>, transform_indices = @transform_2, window_bounds = array<i64: 1, 64>}, {transform_indices = @transform_3, window_bounds = array<i64: 32, 64>}]} {
    %c0 = arith.constant 0 : index
    %c0_0 = arith.constant 0 : index
    %0 = vector.load %arg1[%c0, %c0_0] : memref<32x6xf32, #tpu.memory_space<vmem>>, vector<32x6xf32>
    %c0_1 = arith.constant 0 : index
    %c0_2 = arith.constant 0 : index
    %1 = vector.load %arg2[%c0_1, %c0_2] : memref<6x64xf32, #tpu.memory_space<vmem>>, vector<6x64xf32>
    %cst = arith.constant dense<0.000000e+00> : vector<32x64xf32>
    %2 = tpu.matmul %0, %1, %cst {dimension_numbers = #tpu.dot_dimension_numbers<[1], [0], [0], [1], [0, 0, 1, 1], [], []>} : vector<32x6xf32>, vector<6x64xf32>, vector<32x64xf32> -> vector<32x64xf32>
    %c0_3 = arith.constant 0 : index
    %c0_4 = arith.constant 0 : index
    %3 = vector.load %arg3[%c0_3, %c0_4] : memref<1x64xf32, #tpu.memory_space<vmem>>, vector<1x64xf32>
    %4 = vector.broadcast %3 : vector<1x64xf32> to vector<32x64xf32>
    %5 = arith.addf %2, %4 : vector<32x64xf32>
    %c0_5 = arith.constant 0 : index
    %c0_6 = arith.constant 0 : index
    %6 = vector.load %arg4[%c0_5, %c0_6] : memref<32x64xf32, #tpu.memory_space<vmem>>, vector<32x64xf32>
    tpu.vector_store %arg4[%c0_5, %c0_6], %5 {strides = array<i32>} : memref<32x64xf32, #tpu.memory_space<vmem>>, vector<32x64xf32>,
    return
  }
  func.func @transform_0(%arg0: i32) -> (i32, i32) {
    %c0_i32 = arith.constant 0 : i32
    %c0_i32_0 = arith.constant 0 : i32
    return %arg0, %c0_i32 : i32, i32
  }
  func.func @transform_1(%arg0: i32) -> (i32, i32) {
    %c0_i32 = arith.constant 0 : i32
    %c0_i32_0 = arith.constant 0 : i32
    %c0_i32_1 = arith.constant 0 : i32
    return %c0_i32, %c0_i32_0 : i32, i32
  }
  func.func @transform_2(%arg0: i32) -> (i32, i32) {
    %c0_i32 = arith.constant 0 : i32
    %c0_i32_0 = arith.constant 0 : i32
    %c0_i32_1 = arith.constant 0 : i32
    return %c0_i32, %c0_i32_0 : i32, i32
  }
  func.func @transform_3(%arg0: i32) -> (i32, i32) {
    %c0_i32 = arith.constant 0 : i32
    %c0_i32_0 = arith.constant 0 : i32
    return %arg0, %c0_i32 : i32, i32
  }
}

</mosaic_0001>

<llo_original>
// kernel: tpu_custom_call.1
$region0: #{tpu_custom_call.1}
  #allocation0 [shape = 'u32[]', space=smem, size = 0x4, offset = 0x4, fixed_abs, tag = 'smem constant byte address 0x4 - core index']
  #allocation1 [shape = 'u32[72,128]{1,0:T(1,128)}', space=vmem, size = 0x9000, scoped, tag = 'internal scratch']
  %s0 = inlined_call_operand.vmem [shape: f32[32,6], index: 0, kind: input, shape index: {}]
  %s1 = inlined_call_operand.vmem [shape: f32[6,64], index: 1, kind: input, shape index: {}]
  %s2 = inlined_call_operand.vmem [shape: f32[1,64], index: 2, kind: input, shape index: {}]
  %s3 = inlined_call_operand.hbm [shape: f32[32,64], index: 3, kind: output, shape index: {}]
  %s4 = sld [smem:[#allocation0]]
  $region22: #{tpu_custom_call.1} parent=0
    _
  %s6 = ssub.s32 1, %s4
  %s7 = scalar_select 0, %s6, %s4
  $region1: #{tpu_custom_call.1} parent=0
    #allocation2 [shape = 'u8[16384]{0}', space=vmem, size = 0x4000, scoped, tag = 'output window, operand 0, single buffered']
    #allocation3 [shape = 's32[1]{0}', space=sflag, size = 0x4, scoped, tag = 'scoped memory for tpu_custom_call.1']
    %8 = vsyncpa [#allocation3], 0
    // Predicated region
    $region2: #{tpu_custom_call.1} parent=1 // pred_check
      _
    $region3: #{tpu_custom_call.1} parent=1 // pred_check_branch
      %10 = sbr.rel (0) target = $region5
    $region4: #{tpu_custom_call.1} parent=1 // pred_region
      _
    $region5: #{tpu_custom_call.1} parent=1 // pred_fallthru
      _
    // Predicated region
    $region6: #{tpu_custom_call.1} parent=1 // pred_check
      _
    $region7: #{tpu_custom_call.1} parent=1 // pred_check_branch
      %12 = sbr.rel (0) target = $region9
    $region8: #{tpu_custom_call.1} parent=1 // pred_region
      _
    $region9: #{tpu_custom_call.1} parent=1 // pred_fallthru
      _
    // Predicated region
    $region10: #{tpu_custom_call.1} parent=1 // pred_check
      _
    $region11: #{tpu_custom_call.1} parent=1 // pred_check_branch
      %14 = sbr.rel (0) target = $region13
    $region12: #{tpu_custom_call.1} parent=1 // pred_region
      _
    $region13: #{tpu_custom_call.1} parent=1 // pred_fallthru
      _
    %v15 = vld [vmem:[%s0] sm:$0xff]
    %v16 = vld [vmem:[%s0 + $0x8] sm:$0xff]
    %v17 = vld [vmem:[%s0 + $0x10] sm:$0xff]
    %v18 = vld [vmem:[%s0 + $0x18] sm:$0xff]
    %v19 = vld [vmem:[%s1] sm:$0x3f]
    %v20 = vld [vmem:[%s2] sm:$0x1]
    %v22 = vperm.slane %v20, 0
    %vm24 = vcmask 48128
    %v26 = vsel %vm24, %v15, 0
    %v29 = vsel %vm24, %v16, 0
    %v32 = vsel %vm24, %v17, 0
    %v35 = vsel %vm24, %v18, 0
    %vm37 = vcmask 1045504
    %v39 = vsel %vm37, %v19, 0
    %41 = vmatpush.msra.mxu0 0.0
    %42 = vmatpush.msra.mxu0 0.0
    %43 = vmatpush.msra.mxu0 0.0
    %44 = vmatpush.msra.mxu0 0.0
    %45 = vmatpush.msra.mxu0 0.0
    %46 = vmatpush.msra.mxu0 0.0
    %47 = vmatpush.msra.mxu0 0.0
    %48 = vmatpush.msra.mxu0 0.0
    %49 = vmatpush.msra.mxu0 0.0
    %50 = vmatpush.msra.mxu0 0.0
    %51 = vmatpush.msra.mxu0 0.0
    %52 = vmatpush.msra.mxu0 0.0
    %53 = vmatpush.msra.mxu0 0.0
    %54 = vmatpush.msra.mxu0 0.0
    %55 = vmatpush.msra.mxu0 0.0
    %56 = vmatpush.msra.mxu0 %v39
    %57 = vmatmul.f32.gmra.mxu0 %v26
    %v58 = vpop.f32.mrf.mxu0
    %v59 = vadd.f32 %v22, %v58
    %60 = vmatmul.f32.gmra.mxu0 %v29
    %v61 = vpop.f32.mrf.mxu0
    %v62 = vadd.f32 %v22, %v61
    %63 = vmatmul.f32.gmra.mxu0 %v32
    %v64 = vpop.f32.mrf.mxu0
    %v65 = vadd.f32 %v22, %v64
    %66 = vmatmul.f32.gmra.mxu0 %v35
    %v67 = vpop.f32.mrf.mxu0
    %v68 = vadd.f32 %v22, %v67
    %69 = vdwg.mxu0
    %vm70 = vcmask 523264
    %71 = vst.msk [vmem:[#allocation2] sm:$0xff] %vm70, %v59
    %72 = vst.msk [vmem:[#allocation2 + $0x8] sm:$0xff] %vm70, %v62
    %73 = vst.msk [vmem:[#allocation2 + $0x10] sm:$0xff] %vm70, %v65
    %74 = vst.msk [vmem:[#allocation2 + $0x18] sm:$0xff] %vm70, %v68
    // Predicated region
    $region14: #{tpu_custom_call.1} parent=1 // pred_check
      _
    $region15: #{tpu_custom_call.1} parent=1 // pred_check_branch
      %76 = sbr.rel (0) target = $region17
    $region16: #{tpu_custom_call.1} parent=1 // pred_region
      %78 = vsyncadd [#allocation3], 0
      %s79 = sshll.u32 [#allocation2], 4
      %s80 = int_to_ptr.vmem [resolvable:$true] %s79
      %s81 = sshll.u32 %s3, 4
      %s82 = int_to_ptr.hbm [resolvable:$true] %s81
      %87 = dma.vmem_to_hbm [thread:$0]  %s80, 512, %s82, [#allocation3], 128, 128, 8
    $region17: #{tpu_custom_call.1} parent=1 // pred_fallthru
      _
    // Predicated region
    $region18: #{tpu_custom_call.1} parent=1 // pred_check
      _
    $region19: #{tpu_custom_call.1} parent=1 // pred_check_branch
      %89 = sbr.rel (0) target = $region21
    $region20: #{tpu_custom_call.1} parent=1 // pred_region
      %91 = dma.done [#allocation3], 512
    $region21: #{tpu_custom_call.1} parent=1 // pred_fallthru
      _
    %92 = vsyncpa [#allocation3], 1

</llo_original>
